<compile_context>
chip_gen: v5e
topology: v5e:2x2
jax: 0.10.0
libtpu: 0.0.40
codegen_flags: <defaults>
</compile_context>

<pallas_src>
import functools

import jax
import jax.numpy as jnp
from jax.experimental import pallas as pl
from jax.experimental.pallas import tpu as pltpu


def _round_up(x, m):
    return ((x + m - 1) // m) * m


# --------------------------------------------------------------------------- #
# Kernel
# --------------------------------------------------------------------------- #
def _mlp_group_kernel(x_ref, w_ref, b_ref, o_ref, *, num_layers, row_chunk,
                      num_chunks):
    """One (group, batch-tile) step of the packed ensemble MLP.

    x_ref : (1, bt_rows, P)   packed activations (bf16)
    w_ref : (1, L, P, P)      block-diagonal packed weights (bf16), B-tile
                              resident (index_map ignores the B-tile axis)
    b_ref : (1, L, 1, P)      packed biases (f32)
    o_ref : (1, bt_rows, P)   packed output (bf16)
    """

    def mlp(h):
        # Static unroll over the 7 layers; f32 accumulation, bf16 MXU operands.
        for k in range(num_layers):
            w = w_ref[0, k]                       # (P, P) bf16
            b = b_ref[0, k]                       # (1, P) f32
            h = jnp.dot(h.astype(w.dtype), w,
                        preferred_element_type=jnp.float32) + b
            if k < num_layers - 1:                # last_fc has no ReLU
                h = jnp.maximum(h, 0.0)
        return h

    if num_chunks == 1:
        o_ref[0] = mlp(x_ref[0]).astype(o_ref.dtype)
    else:
        # Fixed-size row chunks: MXU-efficient M, bounded vreg pressure.
        def chunk_body(c, carry):
            r0 = pl.multiple_of(c * row_chunk, row_chunk)
            rows = pl.ds(r0, row_chunk)
            o_ref[0, rows, :] = mlp(x_ref[0, rows, :]).astype(o_ref.dtype)
            return carry

        jax.lax.fori_loop(0, num_chunks, chunk_body, 0,
                          unroll=(num_chunks <= 8))


# --------------------------------------------------------------------------- #
# Init-time packing (cache these; do NOT rebuild per forward call)
# --------------------------------------------------------------------------- #
def pack_ensemble_params(weights, biases, *, members_per_group=2,
                         compute_dtype=jnp.bfloat16):
    """weights[k]: (E, D_k, D_{k+1});  biases[k]: (E, 1, D_{k+1}) or (E, D_{k+1})."""
    E = int(weights[0].shape[0])
    L = len(weights)
    dims = [int(weights[0].shape[1])] + [int(w.shape[-1]) for w in weights]
    D_in, D_out = dims[0], dims[-1]

    mpg = members_per_group
    if 128 % mpg != 0:
        mpg = 1
    # Pad E with zero members instead of silently falling back to mpg=1.
    E_pad = _round_up(E, mpg)
    G = E_pad // mpg

    lane_q = 128 // mpg                    # per-member lane width quantum
    pad = _round_up(max(dims), lane_q)     # per-member padded feature width
    P = mpg * pad                          # packed (lane) width, multiple of 128

    w_packed = jnp.zeros((G, L, P, P), compute_dtype)
    b_packed = jnp.zeros((G, L, 1, P), jnp.float32)
    for k in range(L):
        dk, dk1 = dims[k], dims[k + 1]
        wk = jnp.asarray(weights[k], compute_dtype)
        bk = jnp.asarray(biases[k], jnp.float32).reshape(E, 1, dk1)
        if E_pad != E:
            wk = jnp.concatenate(
                [wk, jnp.zeros((E_pad - E, dk, dk1), compute_dtype)], axis=0)
            bk = jnp.concatenate(
                [bk, jnp.zeros((E_pad - E, 1, dk1), jnp.float32)], axis=0)
        wk = wk.reshape(G, mpg, dk, dk1)
        bk = bk.reshape(G, mpg, 1, dk1)
        for m in range(mpg):               # init-time only
            w_packed = w_packed.at[:, k, m * pad:m * pad + dk,
                                   m * pad:m * pad + dk1].set(wk[:, m])
            b_packed = b_packed.at[:, k, :,
                                   m * pad:m * pad + dk1].set(bk[:, m])

    meta = dict(E=E, E_pad=E_pad, G=G, mpg=mpg, pad=pad, P=P, L=L,
                D_in=D_in, D_out=D_out, compute_dtype=compute_dtype)
    return w_packed, b_packed, meta


def _vmem_limit_bytes(bt_rows, P, L, compute_dtype, out_dtype):
    cb = jnp.dtype(compute_dtype).itemsize
    ob = jnp.dtype(out_dtype).itemsize
    per_step = (bt_rows * P * cb            # x block
                + bt_rows * P * ob          # out block
                + L * P * P * cb            # weight slab
                + L * P * 4)                # bias slab
    need = 2 * per_step                     # double buffering
    # Generous headroom, capped at 48 MiB so it also fits v7x's 64 MiB VMEM.
    return int(min(max(4 * need, 32 * 1024 * 1024), 48 * 1024 * 1024))


# --------------------------------------------------------------------------- #
# Forward (per-call path: pack activations, run kernel, unpack)
# --------------------------------------------------------------------------- #
def ensemble_transition_predictor_packed(inputs, w_packed, b_packed, meta, *,
                                         b_tile_rows=2048, row_chunk=256,
                                         out_dtype=jnp.bfloat16,
                                         interpret=False):
    """inputs: (E, B, D_in) -> (E, B, D_out)."""
    E, B, D_in = inputs.shape
    assert E == meta["E"] and D_in == meta["D_in"]
    E_pad, G = meta["E_pad"], meta["G"]
    mpg, pad, P, L = meta["mpg"], meta["pad"], meta["P"], meta["L"]
    D_out = meta["D_out"]
    compute_dtype = meta["compute_dtype"]

    # ---- batch tiling geometry (bf16 tiles are 16 rows tall) ----
    B16 = _round_up(B, 16)
    row_chunk = _round_up(min(row_chunk, B16), 16)
    bt_rows = min(b_tile_rows, _round_up(B16, row_chunk))
    bt_rows = _round_up(bt_rows, row_chunk)
    B_pad = _round_up(B16, bt_rows)
    num_b_tiles = B_pad // bt_rows
    num_chunks = bt_rows // row_chunk

    # ---- pack activations: (E, B, D_in) -> (G, B_pad, P) (single pad+transpose) ----
    x = inputs.astype(compute_dtype)
    if E_pad != E:
        x = jnp.concatenate(
            [x, jnp.zeros((E_pad - E, B, D_in), compute_dtype)], axis=0)
    x = jnp.pad(x, ((0, 0), (0, B_pad - B), (0, pad - D_in)))
    x = x.reshape(G, mpg, B_pad, pad).transpose(0, 2, 1, 3).reshape(G, B_pad, P)

    kernel = functools.partial(_mlp_group_kernel, num_layers=L,
                               row_chunk=row_chunk, num_chunks=num_chunks)

    out_packed = pl.pallas_call(
        kernel,
        out_shape=jax.ShapeDtypeStruct((G, B_pad, P), out_dtype),
        grid_spec=pl.GridSpec(
            # g OUTER, B-tile INNER: weight/bias blocks are revisited across
            # all B tiles of a group -> DMA'd only when g changes.
            grid=(G, num_b_tiles),
            in_specs=[
                pl.BlockSpec((1, bt_rows, P), lambda g, bt: (g, bt, 0)),
                pl.BlockSpec((1, L, P, P), lambda g, bt: (g, 0, 0, 0)),
                pl.BlockSpec((1, L, 1, P), lambda g, bt: (g, 0, 0, 0)),
            ],
            out_specs=pl.BlockSpec((1, bt_rows, P), lambda g, bt: (g, bt, 0)),
        ),
        compiler_params=pltpu.CompilerParams(
            dimension_semantics=("parallel", "parallel"),
            vmem_limit_bytes=_vmem_limit_bytes(bt_rows, P, L, compute_dtype,
                                               out_dtype)),
        interpret=interpret,
    )(x, w_packed, b_packed)

    # ---- unpack: (G, B_pad, P) -> (E, B, D_out) ----
    out = out_packed.reshape(G, B_pad, mpg, pad).transpose(0, 2, 1, 3)
    out = out.reshape(E_pad, B_pad, pad)[:E, :B, :D_out]
    return out.astype(inputs.dtype)


def ensemble_transition_predictor(inputs, weights, biases, **kwargs):
    """Convenience one-shot wrapper (packs params then runs the kernel)."""
    pack_kw = {k: kwargs.pop(k) for k in ("members_per_group", "compute_dtype")
               if k in kwargs}
    w_packed, b_packed, meta = pack_ensemble_params(weights, biases, **pack_kw)
    return ensemble_transition_predictor_packed(inputs, w_packed, b_packed,
                                                meta, **kwargs)


# --------------------------------------------------------------------------- #
# Reference + test
# --------------------------------------------------------------------------- #
def _reference(inputs, weights, biases):
    h = inputs.astype(jnp.float32)
    n = len(weights)
    for i, (w, b) in enumerate(zip(weights, biases)):
        h = jnp.einsum("ebi,eio->ebo", h, w) + b
        if i < n - 1:
            h = jnp.maximum(h, 0.0)
    return h


if __name__ == "__main__":
    # Small, deterministic synthetic ensemble (E members of a 7-layer MLP).
    E, B = 4, 8
    D_in, H, D_out = 24, 64, 20
    layer_dims = [D_in, H, H, H, H, H, H, D_out]

    key = jax.random.PRNGKey(0)
    keys = jax.random.split(key, 2 * 7 + 2)

    weights, biases = [], []
    for k in range(7):
        wkey, bkey = keys[2 * k], keys[2 * k + 1]
        fan_in, fan_out = layer_dims[k], layer_dims[k + 1]
        weights.append(
            jax.random.normal(wkey, (E, fan_in, fan_out), jnp.float32) * 0.1)
        biases.append(
            jax.random.normal(bkey, (E, 1, fan_out), jnp.float32) * 0.1)

    # --- init-time packing (cached; analogous to _create_ensemble_list) ---
    w_packed, b_packed, meta = pack_ensemble_params(weights, biases)

    fwd = jax.jit(functools.partial(
        ensemble_transition_predictor_packed,
        w_packed=w_packed, b_packed=b_packed, meta=meta))

    # Test 1: tiny batch (single B-tile, single in-kernel chunk).
    x = jax.random.normal(keys[-2], (E, B, D_in), jnp.float32)
    out = jax.block_until_ready(fwd(x))
    ref = _reference(x, weights, biases)
    assert out.shape == (E, B, D_out)
    # bf16 matmul operands + bf16 output store across 7 layers -> loose tol.
    assert jnp.allclose(out, ref, atol=5e-2, rtol=5e-2), \
        float(jnp.max(jnp.abs(out - ref)))

    # Test 2: exercise the B-tile grid axis + in-kernel row chunking with
    # deliberately small tiles (2 B tiles x 2 chunks each, padded batch).
    B2 = 40
    x2 = jax.random.normal(keys[-1], (E, B2, D_in), jnp.float32)
    out2 = jax.block_until_ready(
        ensemble_transition_predictor_packed(
            x2, w_packed, b_packed, meta, b_tile_rows=32, row_chunk=16))
    ref2 = _reference(x2, weights, biases)
    assert out2.shape == (E, B2, D_out)
    assert jnp.allclose(out2, ref2, atol=5e-2, rtol=5e-2), \
        float(jnp.max(jnp.abs(out2 - ref2)))

    print("KERNEL_OK")
</pallas_src>

<mosaic_0001>
module attributes {stable_mosaic.version = 11 : i64} {
  func.func @_mlp_group_kernel(%arg0: i32, %arg1: i32, %arg2: memref<1x16x128xbf16, #tpu.memory_space<vmem>>, %arg3: memref<1x7x128x128xbf16, #tpu.memory_space<vmem>>, %arg4: memref<1x7x1x128xf32, #tpu.memory_space<vmem>>, %arg5: memref<1x16x128xbf16, #tpu.memory_space<vmem>>) attributes {dimension_semantics = [#tpu.dimension_semantics<parallel>, #tpu.dimension_semantics<parallel>], iteration_bounds = array<i64: 2, 1>, scalar_prefetch = 0 : i64, scratch_operands = 0 : i64, tpu.core_type = #tpu.core_type<tc>, window_params = [{transform_indices = @transform_0, window_bounds = array<i64: 1, 16, 128>}, {transform_indices = @transform_1, window_bounds = array<i64: 1, 7, 128, 128>}, {transform_indices = @transform_2, window_bounds = array<i64: 1, 7, 1, 128>}, {transform_indices = @transform_3, window_bounds = array<i64: 1, 16, 128>}]} {
    %c0 = arith.constant 0 : index
    %c0_0 = arith.constant 0 : index
    %c0_1 = arith.constant 0 : index
    %0 = vector.load %arg2[%c0, %c0_0, %c0_1] : memref<1x16x128xbf16, #tpu.memory_space<vmem>>, vector<1x16x128xbf16>
    %1 = vector.shape_cast %0 : vector<1x16x128xbf16> to vector<16x128xbf16>
    %c0_2 = arith.constant 0 : index
    %c0_3 = arith.constant 0 : index
    %c0_4 = arith.constant 0 : index
    %c0_5 = arith.constant 0 : index
    %2 = vector.load %arg3[%c0_2, %c0_3, %c0_4, %c0_5] : memref<1x7x128x128xbf16, #tpu.memory_space<vmem>>, vector<1x1x128x128xbf16>
    %3 = vector.shape_cast %2 : vector<1x1x128x128xbf16> to vector<128x128xbf16>
    %c0_6 = arith.constant 0 : index
    %c0_7 = arith.constant 0 : index
    %c0_8 = arith.constant 0 : index
    %c0_9 = arith.constant 0 : index
    %4 = vector.load %arg4[%c0_6, %c0_7, %c0_8, %c0_9] : memref<1x7x1x128xf32, #tpu.memory_space<vmem>>, vector<1x1x1x128xf32>
    %5 = vector.shape_cast %4 : vector<1x1x1x128xf32> to vector<1x128xf32>
    %cst = arith.constant dense<0.000000e+00> : vector<16x128xf32>
    %6 = tpu.matmul %1, %3, %cst {dimension_numbers = #tpu.dot_dimension_numbers<[1], [0], [0], [1], [0, 0, 1, 1], [], []>} : vector<16x128xbf16>, vector<128x128xbf16>, vector<16x128xf32> -> vector<16x128xf32>
    %7 = vector.broadcast %5 : vector<1x128xf32> to vector<16x128xf32>
    %8 = arith.addf %6, %7 : vector<16x128xf32>
    %cst_10 = arith.constant 0.000000e+00 : f32
    %9 = vector.broadcast %cst_10 : f32 to vector<16x128xf32>
    %10 = arith.maximumf %8, %9 : vector<16x128xf32>
    %c0_11 = arith.constant 0 : index
    %c1 = arith.constant 1 : index
    %c0_12 = arith.constant 0 : index
    %c0_13 = arith.constant 0 : index
    %11 = vector.load %arg3[%c0_11, %c1, %c0_12, %c0_13] : memref<1x7x128x128xbf16, #tpu.memory_space<vmem>>, vector<1x1x128x128xbf16>
    %12 = vector.shape_cast %11 : vector<1x1x128x128xbf16> to vector<128x128xbf16>
    %c0_14 = arith.constant 0 : index
    %c1_15 = arith.constant 1 : index
    %c0_16 = arith.constant 0 : index
    %c0_17 = arith.constant 0 : index
    %13 = vector.load %arg4[%c0_14, %c1_15, %c0_16, %c0_17] : memref<1x7x1x128xf32, #tpu.memory_space<vmem>>, vector<1x1x1x128xf32>
    %14 = vector.shape_cast %13 : vector<1x1x1x128xf32> to vector<1x128xf32>
    %15 = arith.truncf %10 : vector<16x128xf32> to vector<16x128xbf16>
    %cst_18 = arith.constant dense<0.000000e+00> : vector<16x128xf32>
    %16 = tpu.matmul %15, %12, %cst_18 {dimension_numbers = #tpu.dot_dimension_numbers<[1], [0], [0], [1], [0, 0, 1, 1], [], []>} : vector<16x128xbf16>, vector<128x128xbf16>, vector<16x128xf32> -> vector<16x128xf32>
    %17 = vector.broadcast %14 : vector<1x128xf32> to vector<16x128xf32>
    %18 = arith.addf %16, %17 : vector<16x128xf32>
    %cst_19 = arith.constant 0.000000e+00 : f32
    %19 = vector.broadcast %cst_19 : f32 to vector<16x128xf32>
    %20 = arith.maximumf %18, %19 : vector<16x128xf32>
    %c0_20 = arith.constant 0 : index
    %c2 = arith.constant 2 : index
    %c0_21 = arith.constant 0 : index
    %c0_22 = arith.constant 0 : index
    %21 = vector.load %arg3[%c0_20, %c2, %c0_21, %c0_22] : memref<1x7x128x128xbf16, #tpu.memory_space<vmem>>, vector<1x1x128x128xbf16>
    %22 = vector.shape_cast %21 : vector<1x1x128x128xbf16> to vector<128x128xbf16>
    %c0_23 = arith.constant 0 : index
    %c2_24 = arith.constant 2 : index
    %c0_25 = arith.constant 0 : index
    %c0_26 = arith.constant 0 : index
    %23 = vector.load %arg4[%c0_23, %c2_24, %c0_25, %c0_26] : memref<1x7x1x128xf32, #tpu.memory_space<vmem>>, vector<1x1x1x128xf32>
    %24 = vector.shape_cast %23 : vector<1x1x1x128xf32> to vector<1x128xf32>
    %25 = arith.truncf %20 : vector<16x128xf32> to vector<16x128xbf16>
    %cst_27 = arith.constant dense<0.000000e+00> : vector<16x128xf32>
    %26 = tpu.matmul %25, %22, %cst_27 {dimension_numbers = #tpu.dot_dimension_numbers<[1], [0], [0], [1], [0, 0, 1, 1], [], []>} : vector<16x128xbf16>, vector<128x128xbf16>, vector<16x128xf32> -> vector<16x128xf32>
    %27 = vector.broadcast %24 : vector<1x128xf32> to vector<16x128xf32>
    %28 = arith.addf %26, %27 : vector<16x128xf32>
    %cst_28 = arith.constant 0.000000e+00 : f32
    %29 = vector.broadcast %cst_28 : f32 to vector<16x128xf32>
    %30 = arith.maximumf %28, %29 : vector<16x128xf32>
    %c0_29 = arith.constant 0 : index
    %c3 = arith.constant 3 : index
    %c0_30 = arith.constant 0 : index
    %c0_31 = arith.constant 0 : index
    %31 = vector.load %arg3[%c0_29, %c3, %c0_30, %c0_31] : memref<1x7x128x128xbf16, #tpu.memory_space<vmem>>, vector<1x1x128x128xbf16>
    %32 = vector.shape_cast %31 : vector<1x1x128x128xbf16> to vector<128x128xbf16>
    %c0_32 = arith.constant 0 : index
    %c3_33 = arith.constant 3 : index
    %c0_34 = arith.constant 0 : index
    %c0_35 = arith.constant 0 : index
    %33 = vector.load %arg4[%c0_32, %c3_33, %c0_34, %c0_35] : memref<1x7x1x128xf32, #tpu.memory_space<vmem>>, vector<1x1x1x128xf32>
    %34 = vector.shape_cast %33 : vector<1x1x1x128xf32> to vector<1x128xf32>
    %35 = arith.truncf %30 : vector<16x128xf32> to vector<16x128xbf16>
    %cst_36 = arith.constant dense<0.000000e+00> : vector<16x128xf32>
    %36 = tpu.matmul %35, %32, %cst_36 {dimension_numbers = #tpu.dot_dimension_numbers<[1], [0], [0], [1], [0, 0, 1, 1], [], []>} : vector<16x128xbf16>, vector<128x128xbf16>, vector<16x128xf32> -> vector<16x128xf32>
    %37 = vector.broadcast %34 : vector<1x128xf32> to vector<16x128xf32>
    %38 = arith.addf %36, %37 : vector<16x128xf32>
    %cst_37 = arith.constant 0.000000e+00 : f32
    %39 = vector.broadcast %cst_37 : f32 to vector<16x128xf32>
    %40 = arith.maximumf %38, %39 : vector<16x128xf32>
    %c0_38 = arith.constant 0 : index
    %c4 = arith.constant 4 : index
    %c0_39 = arith.constant 0 : index
    %c0_40 = arith.constant 0 : index
    %41 = vector.load %arg3[%c0_38, %c4, %c0_39, %c0_40] : memref<1x7x128x128xbf16, #tpu.memory_space<vmem>>, vector<1x1x128x128xbf16>
    %42 = vector.shape_cast %41 : vector<1x1x128x128xbf16> to vector<128x128xbf16>
    %c0_41 = arith.constant 0 : index
    %c4_42 = arith.constant 4 : index
    %c0_43 = arith.constant 0 : index
    %c0_44 = arith.constant 0 : index
    %43 = vector.load %arg4[%c0_41, %c4_42, %c0_43, %c0_44] : memref<1x7x1x128xf32, #tpu.memory_space<vmem>>, vector<1x1x1x128xf32>
    %44 = vector.shape_cast %43 : vector<1x1x1x128xf32> to vector<1x128xf32>
    %45 = arith.truncf %40 : vector<16x128xf32> to vector<16x128xbf16>
    %cst_45 = arith.constant dense<0.000000e+00> : vector<16x128xf32>
    %46 = tpu.matmul %45, %42, %cst_45 {dimension_numbers = #tpu.dot_dimension_numbers<[1], [0], [0], [1], [0, 0, 1, 1], [], []>} : vector<16x128xbf16>, vector<128x128xbf16>, vector<16x128xf32> -> vector<16x128xf32>
    %47 = vector.broadcast %44 : vector<1x128xf32> to vector<16x128xf32>
    %48 = arith.addf %46, %47 : vector<16x128xf32>
    %cst_46 = arith.constant 0.000000e+00 : f32
    %49 = vector.broadcast %cst_46 : f32 to vector<16x128xf32>
    %50 = arith.maximumf %48, %49 : vector<16x128xf32>
    %c0_47 = arith.constant 0 : index
    %c5 = arith.constant 5 : index
    %c0_48 = arith.constant 0 : index
    %c0_49 = arith.constant 0 : index
    %51 = vector.load %arg3[%c0_47, %c5, %c0_48, %c0_49] : memref<1x7x128x128xbf16, #tpu.memory_space<vmem>>, vector<1x1x128x128xbf16>
    %52 = vector.shape_cast %51 : vector<1x1x128x128xbf16> to vector<128x128xbf16>
    %c0_50 = arith.constant 0 : index
    %c5_51 = arith.constant 5 : index
    %c0_52 = arith.constant 0 : index
    %c0_53 = arith.constant 0 : index
    %53 = vector.load %arg4[%c0_50, %c5_51, %c0_52, %c0_53] : memref<1x7x1x128xf32, #tpu.memory_space<vmem>>, vector<1x1x1x128xf32>
    %54 = vector.shape_cast %53 : vector<1x1x1x128xf32> to vector<1x128xf32>
    %55 = arith.truncf %50 : vector<16x128xf32> to vector<16x128xbf16>
    %cst_54 = arith.constant dense<0.000000e+00> : vector<16x128xf32>
    %56 = tpu.matmul %55, %52, %cst_54 {dimension_numbers = #tpu.dot_dimension_numbers<[1], [0], [0], [1], [0, 0, 1, 1], [], []>} : vector<16x128xbf16>, vector<128x128xbf16>, vector<16x128xf32> -> vector<16x128xf32>
    %57 = vector.broadcast %54 : vector<1x128xf32> to vector<16x128xf32>
    %58 = arith.addf %56, %57 : vector<16x128xf32>
    %cst_55 = arith.constant 0.000000e+00 : f32
    %59 = vector.broadcast %cst_55 : f32 to vector<16x128xf32>
    %60 = arith.maximumf %58, %59 : vector<16x128xf32>
    %c0_56 = arith.constant 0 : index
    %c6 = arith.constant 6 : index
    %c0_57 = arith.constant 0 : index
    %c0_58 = arith.constant 0 : index
    %61 = vector.load %arg3[%c0_56, %c6, %c0_57, %c0_58] : memref<1x7x128x128xbf16, #tpu.memory_space<vmem>>, vector<1x1x128x128xbf16>
    %62 = vector.shape_cast %61 : vector<1x1x128x128xbf16> to vector<128x128xbf16>
    %c0_59 = arith.constant 0 : index
    %c6_60 = arith.constant 6 : index
    %c0_61 = arith.constant 0 : index
    %c0_62 = arith.constant 0 : index
    %63 = vector.load %arg4[%c0_59, %c6_60, %c0_61, %c0_62] : memref<1x7x1x128xf32, #tpu.memory_space<vmem>>, vector<1x1x1x128xf32>
    %64 = vector.shape_cast %63 : vector<1x1x1x128xf32> to vector<1x128xf32>
    %65 = arith.truncf %60 : vector<16x128xf32> to vector<16x128xbf16>
    %cst_63 = arith.constant dense<0.000000e+00> : vector<16x128xf32>
    %66 = tpu.matmul %65, %62, %cst_63 {dimension_numbers = #tpu.dot_dimension_numbers<[1], [0], [0], [1], [0, 0, 1, 1], [], []>} : vector<16x128xbf16>, vector<128x128xbf16>, vector<16x128xf32> -> vector<16x128xf32>
    %67 = vector.broadcast %64 : vector<1x128xf32> to vector<16x128xf32>
    %68 = arith.addf %66, %67 : vector<16x128xf32>
    %69 = arith.truncf %68 : vector<16x128xf32> to vector<16x128xbf16>
    %c0_64 = arith.constant 0 : index
    %c0_65 = arith.constant 0 : index
    %c0_66 = arith.constant 0 : index
    %70 = vector.load %arg5[%c0_64, %c0_65, %c0_66] : memref<1x16x128xbf16, #tpu.memory_space<vmem>>, vector<1x16x128xbf16>
    %71 = vector.shape_cast %70 : vector<1x16x128xbf16> to vector<16x128xbf16>
    %72 = vector.shape_cast %69 : vector<16x128xbf16> to vector<1x16x128xbf16>
    tpu.vector_store %arg5[%c0_64, %c0_65, %c0_66], %72 {strides = array<i32>} : memref<1x16x128xbf16, #tpu.memory_space<vmem>>, vector<1x16x128xbf16>,
    return
  }
  func.func @transform_0(%arg0: i32, %arg1: i32) -> (i32, i32, i32) {
    %c0_i32 = arith.constant 0 : i32
    %c0_i32_0 = arith.constant 0 : i32
    return %arg0, %arg1, %c0_i32 : i32, i32, i32
  }
  func.func @transform_1(%arg0: i32, %arg1: i32) -> (i32, i32, i32, i32) {
    %c0_i32 = arith.constant 0 : i32
    %c0_i32_0 = arith.constant 0 : i32
    %c0_i32_1 = arith.constant 0 : i32
    %c0_i32_2 = arith.constant 0 : i32
    return %arg0, %c0_i32, %c0_i32_0, %c0_i32_1 : i32, i32, i32, i32
  }
  func.func @transform_2(%arg0: i32, %arg1: i32) -> (i32, i32, i32, i32) {
    %c0_i32 = arith.constant 0 : i32
    %c0_i32_0 = arith.constant 0 : i32
    %c0_i32_1 = arith.constant 0 : i32
    %c0_i32_2 = arith.constant 0 : i32
    return %arg0, %c0_i32, %c0_i32_0, %c0_i32_1 : i32, i32, i32, i32
  }
  func.func @transform_3(%arg0: i32, %arg1: i32) -> (i32, i32, i32) {
    %c0_i32 = arith.constant 0 : i32
    %c0_i32_0 = arith.constant 0 : i32
    return %arg0, %arg1, %c0_i32 : i32, i32, i32
  }
}

</mosaic_0001>

<llo_original>
// kernel: ensemble_transition_predictor_packed.1
$region0: #{ensemble_transition_predictor_packed.1}
  #allocation0 [shape = 'u32[]', space=smem, size = 0x4, offset = 0x4, fixed_abs, tag = 'smem constant byte address 0x4 - core index']
  #allocation1 [shape = 'u32[72,128]{1,0:T(1,128)}', space=vmem, size = 0x9000, scoped, tag = 'internal scratch']
  %s0 = inlined_call_operand.vmem [shape: bf16[2,16,128], index: 0, kind: input, shape index: {}]
  %s1 = inlined_call_operand.hbm [shape: bf16[2,7,128,128], index: 1, kind: input, shape index: {}]
  %s2 = inlined_call_operand.vmem [shape: f32[2,7,1,128], index: 2, kind: input, shape index: {}]
  %s3 = inlined_call_operand.vmem [shape: bf16[2,16,128], index: 3, kind: output, shape index: {}]
  %s4 = sld [smem:[#allocation0]]
  $region49: #{ensemble_transition_predictor_packed.1} parent=0
    _
  %s6 = ssub.s32 1, %s4
  %s7 = scalar_select 0, %s6, %s4
  $region1: #{ensemble_transition_predictor_packed.1} parent=0
    #allocation2 [shape = 'u8[458752]{0}', space=vmem, size = 0x70000, scoped, tag = 'input window, operand 1']
    #allocation3 [shape = 's32[2]{0}', space=sflag, size = 0x8, scoped, tag = 'scoped memory for ensemble_transition_predictor_packed.1']
    %8 = vsyncpa [#allocation3], 0
    %s9 = scalar_lea.sflag [#allocation3], 1
    %10 = vsyncpa %s9, 0
    loop: start=0, step=1, limit=4
    $region2: #{ensemble_transition_predictor_packed.1} parent=1 // loop_pre_header
      _
    $region3: #{ensemble_transition_predictor_packed.1} parent=1 // loop_header
      %s12 = sphi 0, %s16
      %p13 = scmp.ge.s32.totalorder %s12, 4
      %s19 = sphi 0, %s31
      %s20 = sphi 0, %s27
      %s21 = sphi 0, %s19
      %s22 = sphi 0, %s20
      %s23 = sphi 0, %s21
      %s24 = sphi 0, %s22
      %s36 = sphi 0, %s38
      %s39 = sphi 0, %s36
      %s40 = sphi 0, %s39
      %s56 = sphi 0, %s40
      %s62 = sphi 0, %s64
      %s65 = sphi 0, %s62
      %s66 = sphi 0, %s65
      %s82 = sphi 0, %s66
      %s88 = sphi 0, %s90
      %s91 = sphi 0, %s88
      %s92 = sphi 0, %s91
      %s108 = sphi 0, %s92
      %s116 = sphi 0, %s118
      %s119 = sphi 0, %s116
      %s120 = sphi 0, %s119
      %s136 = sphi 0, %s120
    $region4: #{ensemble_transition_predictor_packed.1} parent=1 // loop_header_branch
      %15 = sbr.rel (%p13) target = $region8
    $region5: #{ensemble_transition_predictor_packed.1} parent=1 // loop_body
      %s17 = ssub.s32 %s12, 1
      %s18 = ssub.s32 %s12, 2
      %s25 = sadd.s32 1, %s20
      %p26 = scmp.ge.s32.totalorder %s25, 1
      %s27 = scalar_select %p26, 0, %s25
      %s28 = sadd.s32 1, %s19
      %s29 = scalar_select %p26, %s28, %s19
      %p30 = scmp.ge.s32.totalorder %s29, 2
      %s31 = scalar_select %p30, 0, %s29
      %s32 = ssub.s32 %s19, %s31
      %s33 = ssub.s32 %s20, %s27
      %s34 = sor.u32 %s32, %s33
      %p35 = scmp.eq.s32.totalorder %s34, 0
      %s37 = sadd.s32 %s36, 1
      %s38 = scalar_select %p35, %s36, %s37
      %p41 = pneg %p35
      %p42 = scmp.eq.s32.totalorder %s12, 1
      %p43 = por %p41, %p42
      %p44 = scmp.ne.s32.totalorder %s36, %s39
      %p45 = scmp.eq.s32.totalorder %s12, 0
      %p46 = por %p44, %p45
      %p47 = scmp.ne.s32.totalorder %s36, %s39
      %p48 = scmp.eq.s32.totalorder %s17, 1
      %p49 = por %p47, %p48
      %p50 = scmp.ne.s32.totalorder %s39, %s40
      %p51 = scmp.eq.s32.totalorder %s17, 0
      %p52 = por %p50, %p51
      %p53 = scmp.ne.s32.totalorder %s39, %s40
      %p54 = scmp.eq.s32.totalorder %s18, 1
      %p55 = por %p53, %p54
      %p57 = scmp.ne.s32.totalorder %s40, %s56
      %p58 = scmp.eq.s32.totalorder %s18, 0
      %p59 = por %p57, %p58
      %s60 = ssub.s32 %s19, %s31
      %p61 = scmp.eq.s32.totalorder %s60, 0
      %s63 = sadd.s32 %s62, 1
      %s64 = scalar_select %p61, %s62, %s63
      %p67 = pneg %p61
      %p68 = scmp.eq.s32.totalorder %s12, 1
      %p69 = por %p67, %p68
      %p70 = scmp.ne.s32.totalorder %s62, %s65
      %p71 = scmp.eq.s32.totalorder %s12, 0
      %p72 = por %p70, %p71
      %p73 = scmp.ne.s32.totalorder %s62, %s65
      %p74 = scmp.eq.s32.totalorder %s17, 1
      %p75 = por %p73, %p74
      %p76 = scmp.ne.s32.totalorder %s65, %s66
      %p77 = scmp.eq.s32.totalorder %s17, 0
      %p78 = por %p76, %p77
      %p79 = scmp.ne.s32.totalorder %s65, %s66
      %p80 = scmp.eq.s32.totalorder %s18, 1
      %p81 = por %p79, %p80
      %p83 = scmp.ne.s32.totalorder %s66, %s82
      %p84 = scmp.eq.s32.totalorder %s18, 0
      %p85 = por %p83, %p84
      %s86 = ssub.s32 %s19, %s31
      %p87 = scmp.eq.s32.totalorder %s86, 0
      %s89 = sadd.s32 %s88, 1
      %s90 = scalar_select %p87, %s88, %s89
      %p93 = pneg %p87
      %p94 = scmp.eq.s32.totalorder %s12, 1
      %p95 = por %p93, %p94
      %p96 = scmp.ne.s32.totalorder %s88, %s91
      %p97 = scmp.eq.s32.totalorder %s12, 0
      %p98 = por %p96, %p97
      %p99 = scmp.ne.s32.totalorder %s88, %s91
      %p100 = scmp.eq.s32.totalorder %s17, 1
      %p101 = por %p99, %p100
      %p102 = scmp.ne.s32.totalorder %s91, %s92
      %p103 = scmp.eq.s32.totalorder %s17, 0
      %p104 = por %p102, %p103
      %p105 = scmp.ne.s32.totalorder %s91, %s92
      %p106 = scmp.eq.s32.totalorder %s18, 1
      %p107 = por %p105, %p106
      %p109 = scmp.ne.s32.totalorder %s92, %s108
      %p110 = scmp.eq.s32.totalorder %s18, 0
      %p111 = por %p109, %p110
      %s112 = ssub.s32 %s19, %s31
      %s113 = ssub.s32 %s20, %s27
      %s114 = sor.u32 %s112, %s113
      %p115 = scmp.eq.s32.totalorder %s114, 0
      %s117 = sadd.s32 %s116, 1
      %s118 = scalar_select %p115, %s116, %s117
      %p121 = pneg %p115
      %p122 = scmp.eq.s32.totalorder %s12, 1
      %p123 = por %p121, %p122
      %p124 = scmp.ne.s32.totalorder %s116, %s119
      %p125 = scmp.eq.s32.totalorder %s12, 0
      %p126 = por %p124, %p125
      %p127 = scmp.ne.s32.totalorder %s116, %s119
      %p128 = scmp.eq.s32.totalorder %s17, 1
      %p129 = por %p127, %p128
      %p130 = scmp.ne.s32.totalorder %s119, %s120
      %p131 = scmp.eq.s32.totalorder %s17, 0
      %p132 = por %p130, %p131
      %p133 = scmp.ne.s32.totalorder %s119, %s120
      %p134 = scmp.eq.s32.totalorder %s18, 1
      %p135 = por %p133, %p134
      %p137 = scmp.ne.s32.totalorder %s120, %s136
      %p138 = scmp.eq.s32.totalorder %s18, 0
      %p139 = por %p137, %p138
      %p140 = scmp.le.s32.totalorder 1, %s12
      %p141 = scmp.lt.s32.totalorder %s12, 3
      %p142 = pnand %p140, %p141
      %p143 = pneg %p142
      // Predicated region
      $region9: #{ensemble_transition_predictor_packed.1} parent=5 // pred_check
        _
      $region10: #{ensemble_transition_predictor_packed.1} parent=5 // pred_check_branch
        %145 = sbr.rel (%p142) target = $region12
      $region11: #{ensemble_transition_predictor_packed.1} parent=5 // pred_region
        %s146 = ssub.s32 %s12, 1
      $region12: #{ensemble_transition_predictor_packed.1} parent=5 // pred_fallthru
        _
      %p147 = scmp.lt.s32.totalorder %s12, 2
      // Predicated region
      $region13: #{ensemble_transition_predictor_packed.1} parent=5 // pred_check
        %p148 = pneg %p147
      $region14: #{ensemble_transition_predictor_packed.1} parent=5 // pred_check_branch
        %150 = sbr.rel (%p148) target = $region16
      $region15: #{ensemble_transition_predictor_packed.1} parent=5 // pred_region
        // Predicated region
        $region17: #{ensemble_transition_predictor_packed.1} parent=15 // pred_check
          %p151 = pneg %p46
        $region18: #{ensemble_transition_predictor_packed.1} parent=15 // pred_check_branch
          %153 = sbr.rel (%p151) target = $region20
        $region19: #{ensemble_transition_predictor_packed.1} parent=15 // pred_region
          %s154 = smul.u32 2, %s20
          %p155 = scmp.lt.s32.totalorder %s19, 1
          %s156 = scalar_select %p155, %s19, 1
          %p157 = scmp.lt.s32.totalorder %s154, 1
          %s158 = scalar_select %p157, %s154, 1
          %s159 = smul.addr %s156, 2
          %s160 = sadd.s32 %s158, %s159
          %s161 = smul.addr %s160, 4
          %s162 = scalar_lea.vmem %s0, %s161
          %s163 = smul.u32 2, %s20
        $region20: #{ensemble_transition_predictor_packed.1} parent=15 // pred_fallthru
          _
        // Predicated region
        $region21: #{ensemble_transition_predictor_packed.1} parent=15 // pred_check
          %p164 = pneg %p72
        $region22: #{ensemble_transition_predictor_packed.1} parent=15 // pred_check_branch
          %166 = sbr.rel (%p164) target = $region24
        $region23: #{ensemble_transition_predictor_packed.1} parent=15 // pred_region
          %s167 = sand.u32 %s62, 1
          %s168 = scalar_lea.sflag [#allocation3], %s167
          %s169 = sand.u32 %s62, 1
          %s170 = smul.addr %s169, 448
          %s171 = scalar_lea.vmem [#allocation2], %s170
          %173 = vsyncadd %s168, 0
          %s174 = smul.addr %s19, 112
          %s175 = smul.addr %s174, 4
          %s176 = scalar_lea.hbm %s1, %s175
          %s177 = sshll.u32 %s176, 4
          %s178 = int_to_ptr.hbm [resolvable:$true] %s177
          %s179 = sshll.u32 %s171, 4
          %s180 = int_to_ptr.vmem [resolvable:$true] %s179
          %185 = dma.hbm_to_vmem [thread:$0]  %s178, 7168, %s180, %s168, 64, 64, 4
        $region24: #{ensemble_transition_predictor_packed.1} parent=15 // pred_fallthru
          _
        // Predicated region
        $region25: #{ensemble_transition_predictor_packed.1} parent=15 // pred_check
          %p186 = pneg %p98
        $region26: #{ensemble_transition_predictor_packed.1} parent=15 // pred_check_branch
          %188 = sbr.rel (%p186) target = $region28
        $region27: #{ensemble_transition_predictor_packed.1} parent=15 // pred_region
          %p189 = scmp.lt.s32.totalorder %s19, 1
          %s190 = scalar_select %p189, %s19, 1
          %s191 = smul.addr %s190, 7
          %s192 = scalar_lea.vmem %s2, %s191
        $region28: #{ensemble_transition_predictor_packed.1} parent=15 // pred_fallthru
          _
      $region16: #{ensemble_transition_predictor_packed.1} parent=5 // pred_fallthru
        _
      %p193 = scmp.le.s32.totalorder 1, %s12
      %p194 = scmp.lt.s32.totalorder %s12, 3
      %p195 = pnand %p193, %p194
      %p196 = pneg %p195
      // Predicated region
      $region29: #{ensemble_transition_predictor_packed.1} parent=5 // pred_check
        _
      $region30: #{ensemble_transition_predictor_packed.1} parent=5 // pred_check_branch
        %198 = sbr.rel (%p195) target = $region32
      $region31: #{ensemble_transition_predictor_packed.1} parent=5 // pred_region
        %s199 = ssub.s32 %s12, 1
        %s200 = sand.u32 %s65, 1
        %s201 = scalar_lea.sflag [#allocation3], %s200
        %s202 = sand.u32 %s65, 1
        %s203 = smul.addr %s202, 448
        %s204 = scalar_lea.vmem [#allocation2], %s203
        // Predicated region
        $region33: #{ensemble_transition_predictor_packed.1} parent=31 // pred_check
          %p205 = pneg %p78
        $region34: #{ensemble_transition_predictor_packed.1} parent=31 // pred_check_branch
          %207 = sbr.rel (%p205) target = $region36
        $region35: #{ensemble_transition_predictor_packed.1} parent=31 // pred_region
          %209 = dma.done %s201, 7168
        $region36: #{ensemble_transition_predictor_packed.1} parent=31 // pred_fallthru
          _
        %s210 = smul.u32 2, %s22
        %p211 = scmp.lt.s32.totalorder %s21, 1
        %s212 = scalar_select %p211, %s21, 1
        %p213 = scmp.lt.s32.totalorder %s210, 1
        %s214 = scalar_select %p213, %s210, 1
        %s215 = smul.addr %s212, 2
        %s216 = sadd.s32 %s214, %s215
        %s217 = smul.addr %s216, 4
        %s218 = scalar_lea.vmem %s0, %s217
        %p219 = pneg %p52
        %p220 = pneg %p49
        %s221 = sand.u32 %s65, 1
        %s222 = scalar_lea.sflag [#allocation3], %s221
        %s223 = sand.u32 %s65, 1
        %s224 = smul.addr %s223, 448
        %s225 = scalar_lea.vmem [#allocation2], %s224
        %p226 = pneg %p78
        %p227 = pneg %p75
        %p228 = scmp.lt.s32.totalorder %s21, 1
        %s229 = scalar_select %p228, %s21, 1
        %s230 = smul.addr %s229, 7
        %s231 = scalar_lea.vmem %s2, %s230
        %p232 = pneg %p104
        %p233 = pneg %p101
        %p234 = pneg %p132
        %p235 = pneg %p129
        %s236 = smul.u32 2, %s22
        %p237 = scmp.lt.s32.totalorder %s21, 1
        %s238 = scalar_select %p237, %s21, 1
        %p239 = scmp.lt.s32.totalorder %s236, 1
        %s240 = scalar_select %p239, %s236, 1
        %s241 = smul.addr %s238, 2
        %s242 = sadd.s32 %s240, %s241
        %s243 = smul.addr %s242, 4
        %s244 = scalar_lea.vmem %s3, %s243
        %s245 = smul.u32 2, %s22
        %p246 = scmp.lt.s32.totalorder %s21, 1
        %s247 = scalar_select %p246, %s21, 1
        %p248 = scmp.lt.s32.totalorder %s245, 1
        %s249 = scalar_select %p248, %s245, 1
        %s250 = smul.addr %s247, 2
        %s251 = sadd.s32 %s249, %s250
        %s252 = smul.addr %s251, 4
        %s253 = scalar_lea.vmem %s0, %s252
        %s254 = smul.u32 2, %s22
        %p255 = scmp.lt.s32.totalorder %s21, 1
        %s256 = scalar_select %p255, %s21, 1
        %s257 = smul.addr %s256, 7
        %s258 = scalar_lea.vmem %s2, %s257
        %s259 = smul.u32 2, %s22
        %p260 = scmp.lt.s32.totalorder %s21, 1
        %s261 = scalar_select %p260, %s21, 1
        %p262 = scmp.lt.s32.totalorder %s259, 1
        %s263 = scalar_select %p262, %s259, 1
        %s264 = smul.addr %s261, 2
        %s265 = sadd.s32 %s263, %s264
        %s266 = smul.addr %s265, 4
        %s267 = scalar_lea.vmem %s3, %s266
        %s268 = smul.u32 2, %s22
        %v269 = vld [vmem:[%s253] sm:$0xf]
        %v270 = vld [vmem:[%s253 + $0x4] sm:$0xf]
        %v271 = vld [vmem:[%s204] sm:$0xf]
        %v272 = vld [vmem:[%s204 + $0x4] sm:$0xf]
        %v273 = vld [vmem:[%s204 + $0x8] sm:$0xf]
        %v274 = vld [vmem:[%s204 + $0xc] sm:$0xf]
        %v275 = vld [vmem:[%s204 + $0x10] sm:$0xf]
        %v276 = vld [vmem:[%s204 + $0x14] sm:$0xf]
        %v277 = vld [vmem:[%s204 + $0x18] sm:$0xf]
        %v278 = vld [vmem:[%s204 + $0x1c] sm:$0xf]
        %v279 = vld [vmem:[%s204 + $0x20] sm:$0xf]
        %v280 = vld [vmem:[%s204 + $0x24] sm:$0xf]
        %v281 = vld [vmem:[%s204 + $0x28] sm:$0xf]
        %v282 = vld [vmem:[%s204 + $0x2c] sm:$0xf]
        %v283 = vld [vmem:[%s204 + $0x30] sm:$0xf]
        %v284 = vld [vmem:[%s204 + $0x34] sm:$0xf]
        %v285 = vld [vmem:[%s204 + $0x38] sm:$0xf]
        %v286 = vld [vmem:[%s204 + $0x3c] sm:$0xf]
        %v287 = vld [vmem:[%s258] sm:$0x1]
        %v289 = vperm.slane %v287, 0
        %v293 = vunpack.c.l.b16 %v269
        %v294 = vunpack.c.l.b16 %v270
        %v295 = vpack.c.b16 %v294, %v293
        %v313 = vunpack.c.l.b16 %v271
        %v314 = vunpack.c.l.b16 %v272
        %v315 = vunpack.c.l.b16 %v273
        %v316 = vunpack.c.l.b16 %v274
        %v317 = vunpack.c.l.b16 %v275
        %v318 = vunpack.c.l.b16 %v276
        %v319 = vunpack.c.l.b16 %v277
        %v320 = vunpack.c.l.b16 %v278
        %v321 = vunpack.c.l.b16 %v279
        %v322 = vunpack.c.l.b16 %v280
        %v323 = vunpack.c.l.b16 %v281
        %v324 = vunpack.c.l.b16 %v282
        %v325 = vunpack.c.l.b16 %v283
        %v326 = vunpack.c.l.b16 %v284
        %v327 = vunpack.c.l.b16 %v285
        %v328 = vunpack.c.l.b16 %v286
        %v329 = vpack.c.b16 %v314, %v313
        %v330 = vpack.c.b16 %v316, %v315
        %v331 = vpack.c.b16 %v318, %v317
        %v332 = vpack.c.b16 %v320, %v319
        %v333 = vpack.c.b16 %v322, %v321
        %v334 = vpack.c.b16 %v324, %v323
        %v335 = vpack.c.b16 %v326, %v325
        %v336 = vpack.c.b16 %v328, %v327
        %345 = vmatpush.bf16.msra.mxu0 %v336
        %346 = vmatpush.bf16.msra.mxu0 %v335
        %347 = vmatpush.bf16.msra.mxu0 %v334
        %348 = vmatpush.bf16.msra.mxu0 %v333
        %349 = vmatpush.bf16.msra.mxu0 %v332
        %350 = vmatpush.bf16.msra.mxu0 %v331
        %351 = vmatpush.bf16.msra.mxu0 %v330
        %352 = vmatpush.bf16.msra.mxu0 %v329
        %353 = vmatmul.bf16.gmra.mxu0 %v295
        %v354 = vpop.f32.mrf.mxu0
        %v355 = vadd.f32 %v289, %v354
        %v356 = vpop.f32.mrf.mxu0
        %v357 = vadd.f32 %v289, %v356
        %358 = vdwg.mxu0
        %v359 = vmax.f32 %v355, 0.0
        %v360 = vmax.f32 %v357, 0.0
        %s361 = scalar_lea.vmem %s204, 64 [#allocation2]
        %v362 = vld [vmem:[%s361] sm:$0xf]
        %v363 = vld [vmem:[%s361 + $0x4] sm:$0xf]
        %v364 = vld [vmem:[%s361 + $0x8] sm:$0xf]
        %v365 = vld [vmem:[%s361 + $0xc] sm:$0xf]
        %v366 = vld [vmem:[%s361 + $0x10] sm:$0xf]
        %v367 = vld [vmem:[%s361 + $0x14] sm:$0xf]
        %v368 = vld [vmem:[%s361 + $0x18] sm:$0xf]
        %v369 = vld [vmem:[%s361 + $0x1c] sm:$0xf]
        %v370 = vld [vmem:[%s361 + $0x20] sm:$0xf]
        %v371 = vld [vmem:[%s361 + $0x24] sm:$0xf]
        %v372 = vld [vmem:[%s361 + $0x28] sm:$0xf]
        %v373 = vld [vmem:[%s361 + $0x2c] sm:$0xf]
        %v374 = vld [vmem:[%s361 + $0x30] sm:$0xf]
        %v375 = vld [vmem:[%s361 + $0x34] sm:$0xf]
        %v376 = vld [vmem:[%s361 + $0x38] sm:$0xf]
        %v377 = vld [vmem:[%s361 + $0x3c] sm:$0xf]
        %s378 = scalar_lea.vmem %s258, 1
        %v379 = vld [vmem:[%s378] sm:$0x1]
        %v380 = vpack.c.bf16 %v360, %v359
        %v382 = vperm.slane %v379, 0
        %v400 = vunpack.c.l.b16 %v362
        %v401 = vunpack.c.l.b16 %v363
        %v402 = vunpack.c.l.b16 %v364
        %v403 = vunpack.c.l.b16 %v365
        %v404 = vunpack.c.l.b16 %v366
        %v405 = vunpack.c.l.b16 %v367
        %v406 = vunpack.c.l.b16 %v368
        %v407 = vunpack.c.l.b16 %v369
        %v408 = vunpack.c.l.b16 %v370
        %v409 = vunpack.c.l.b16 %v371
        %v410 = vunpack.c.l.b16 %v372
        %v411 = vunpack.c.l.b16 %v373
        %v412 = vunpack.c.l.b16 %v374
        %v413 = vunpack.c.l.b16 %v375
        %v414 = vunpack.c.l.b16 %v376
        %v415 = vunpack.c.l.b16 %v377
        %v416 = vpack.c.b16 %v401, %v400
        %v417 = vpack.c.b16 %v403, %v402
        %v418 = vpack.c.b16 %v405, %v404
        %v419 = vpack.c.b16 %v407, %v406
        %v420 = vpack.c.b16 %v409, %v408
        %v421 = vpack.c.b16 %v411, %v410
        %v422 = vpack.c.b16 %v413, %v412
        %v423 = vpack.c.b16 %v415, %v414
        %432 = vmatpush.bf16.msra.mxu0 %v423
        %433 = vmatpush.bf16.msra.mxu0 %v422
        %434 = vmatpush.bf16.msra.mxu0 %v421
        %435 = vmatpush.bf16.msra.mxu0 %v420
        %436 = vmatpush.bf16.msra.mxu0 %v419
        %437 = vmatpush.bf16.msra.mxu0 %v418
        %438 = vmatpush.bf16.msra.mxu0 %v417
        %439 = vmatpush.bf16.msra.mxu0 %v416
        %440 = vmatmul.bf16.gmra.mxu0 %v380
        %v441 = vpop.f32.mrf.mxu0
        %v442 = vadd.f32 %v382, %v441
        %v443 = vpop.f32.mrf.mxu0
        %v444 = vadd.f32 %v382, %v443
        %445 = vdwg.mxu0
        %v446 = vmax.f32 %v442, 0.0
        %v447 = vmax.f32 %v444, 0.0
        %s448 = scalar_lea.vmem %s204, 128 [#allocation2]
        %v449 = vld [vmem:[%s448] sm:$0xf]
        %v450 = vld [vmem:[%s448 + $0x4] sm:$0xf]
        %v451 = vld [vmem:[%s448 + $0x8] sm:$0xf]
        %v452 = vld [vmem:[%s448 + $0xc] sm:$0xf]
        %v453 = vld [vmem:[%s448 + $0x10] sm:$0xf]
        %v454 = vld [vmem:[%s448 + $0x14] sm:$0xf]
        %v455 = vld [vmem:[%s448 + $0x18] sm:$0xf]
        %v456 = vld [vmem:[%s448 + $0x1c] sm:$0xf]
        %v457 = vld [vmem:[%s448 + $0x20] sm:$0xf]
        %v458 = vld [vmem:[%s448 + $0x24] sm:$0xf]
        %v459 = vld [vmem:[%s448 + $0x28] sm:$0xf]
        %v460 = vld [vmem:[%s448 + $0x2c] sm:$0xf]
        %v461 = vld [vmem:[%s448 + $0x30] sm:$0xf]
        %v462 = vld [vmem:[%s448 + $0x34] sm:$0xf]
        %v463 = vld [vmem:[%s448 + $0x38] sm:$0xf]
        %v464 = vld [vmem:[%s448 + $0x3c] sm:$0xf]
        %s465 = scalar_lea.vmem %s258, 2
        %v466 = vld [vmem:[%s465] sm:$0x1]
        %v467 = vpack.c.bf16 %v447, %v446
        %v469 = vperm.slane %v466, 0
        %v487 = vunpack.c.l.b16 %v449
        %v488 = vunpack.c.l.b16 %v450
        %v489 = vunpack.c.l.b16 %v451
        %v490 = vunpack.c.l.b16 %v452
        %v491 = vunpack.c.l.b16 %v453
        %v492 = vunpack.c.l.b16 %v454
        %v493 = vunpack.c.l.b16 %v455
        %v494 = vunpack.c.l.b16 %v456
        %v495 = vunpack.c.l.b16 %v457
        %v496 = vunpack.c.l.b16 %v458
        %v497 = vunpack.c.l.b16 %v459
        %v498 = vunpack.c.l.b16 %v460
        %v499 = vunpack.c.l.b16 %v461
        %v500 = vunpack.c.l.b16 %v462
        %v501 = vunpack.c.l.b16 %v463
        %v502 = vunpack.c.l.b16 %v464
        %v503 = vpack.c.b16 %v488, %v487
        %v504 = vpack.c.b16 %v490, %v489
        %v505 = vpack.c.b16 %v492, %v491
        %v506 = vpack.c.b16 %v494, %v493
        %v507 = vpack.c.b16 %v496, %v495
        %v508 = vpack.c.b16 %v498, %v497
        %v509 = vpack.c.b16 %v500, %v499
        %v510 = vpack.c.b16 %v502, %v501
        %519 = vmatpush.bf16.msra.mxu0 %v510
        %520 = vmatpush.bf16.msra.mxu0 %v509
        %521 = vmatpush.bf16.msra.mxu0 %v508
        %522 = vmatpush.bf16.msra.mxu0 %v507
        %523 = vmatpush.bf16.msra.mxu0 %v506
        %524 = vmatpush.bf16.msra.mxu0 %v505
        %525 = vmatpush.bf16.msra.mxu0 %v504
        %526 = vmatpush.bf16.msra.mxu0 %v503
        %527 = vmatmul.bf16.gmra.mxu0 %v467
        %v528 = vpop.f32.mrf.mxu0
        %v529 = vadd.f32 %v469, %v528
        %v530 = vpop.f32.mrf.mxu0
        %v531 = vadd.f32 %v469, %v530
        %532 = vdwg.mxu0
        %v533 = vmax.f32 %v529, 0.0
        %v534 = vmax.f32 %v531, 0.0
        %s535 = scalar_lea.vmem %s204, 192 [#allocation2]
        %v536 = vld [vmem:[%s535] sm:$0xf]
        %v537 = vld [vmem:[%s535 + $0x4] sm:$0xf]
        %v538 = vld [vmem:[%s535 + $0x8] sm:$0xf]
        %v539 = vld [vmem:[%s535 + $0xc] sm:$0xf]
        %v540 = vld [vmem:[%s535 + $0x10] sm:$0xf]
        %v541 = vld [vmem:[%s535 + $0x14] sm:$0xf]
        %v542 = vld [vmem:[%s535 + $0x18] sm:$0xf]
        %v543 = vld [vmem:[%s535 + $0x1c] sm:$0xf]
        %v544 = vld [vmem:[%s535 + $0x20] sm:$0xf]
        %v545 = vld [vmem:[%s535 + $0x24] sm:$0xf]
        %v546 = vld [vmem:[%s535 + $0x28] sm:$0xf]
        %v547 = vld [vmem:[%s535 + $0x2c] sm:$0xf]
        %v548 = vld [vmem:[%s535 + $0x30] sm:$0xf]
        %v549 = vld [vmem:[%s535 + $0x34] sm:$0xf]
        %v550 = vld [vmem:[%s535 + $0x38] sm:$0xf]
        %v551 = vld [vmem:[%s535 + $0x3c] sm:$0xf]
        %s552 = scalar_lea.vmem %s258, 3
        %v553 = vld [vmem:[%s552] sm:$0x1]
        %v554 = vpack.c.bf16 %v534, %v533
        %v556 = vperm.slane %v553, 0
        %v574 = vunpack.c.l.b16 %v536
        %v575 = vunpack.c.l.b16 %v537
        %v576 = vunpack.c.l.b16 %v538
        %v577 = vunpack.c.l.b16 %v539
        %v578 = vunpack.c.l.b16 %v540
        %v579 = vunpack.c.l.b16 %v541
        %v580 = vunpack.c.l.b16 %v542
        %v581 = vunpack.c.l.b16 %v543
        %v582 = vunpack.c.l.b16 %v544
        %v583 = vunpack.c.l.b16 %v545
        %v584 = vunpack.c.l.b16 %v546
        %v585 = vunpack.c.l.b16 %v547
        %v586 = vunpack.c.l.b16 %v548
        %v587 = vunpack.c.l.b16 %v549
        %v588 = vunpack.c.l.b16 %v550
        %v589 = vunpack.c.l.b16 %v551
        %v590 = vpack.c.b16 %v575, %v574
        %v591 = vpack.c.b16 %v577, %v576
        %v592 = vpack.c.b16 %v579, %v578
        %v593 = vpack.c.b16 %v581, %v580
        %v594 = vpack.c.b16 %v583, %v582
        %v595 = vpack.c.b16 %v585, %v584
        %v596 = vpack.c.b16 %v587, %v586
        %v597 = vpack.c.b16 %v589, %v588
        %606 = vmatpush.bf16.msra.mxu0 %v597
        %607 = vmatpush.bf16.msra.mxu0 %v596
        %608 = vmatpush.bf16.msra.mxu0 %v595
        %609 = vmatpush.bf16.msra.mxu0 %v594
        %610 = vmatpush.bf16.msra.mxu0 %v593
        %611 = vmatpush.bf16.msra.mxu0 %v592
        %612 = vmatpush.bf16.msra.mxu0 %v591
        %613 = vmatpush.bf16.msra.mxu0 %v590
        %614 = vmatmul.bf16.gmra.mxu0 %v554
        %v615 = vpop.f32.mrf.mxu0
        %v616 = vadd.f32 %v556, %v615
        %v617 = vpop.f32.mrf.mxu0
        %v618 = vadd.f32 %v556, %v617
        %619 = vdwg.mxu0
        %v620 = vmax.f32 %v616, 0.0
        %v621 = vmax.f32 %v618, 0.0
        %s622 = scalar_lea.vmem %s204, 256 [#allocation2]
        %v623 = vld [vmem:[%s622] sm:$0xf]
        %v624 = vld [vmem:[%s622 + $0x4] sm:$0xf]
        %v625 = vld [vmem:[%s622 + $0x8] sm:$0xf]
        %v626 = vld [vmem:[%s622 + $0xc] sm:$0xf]
        %v627 = vld [vmem:[%s622 + $0x10] sm:$0xf]
        %v628 = vld [vmem:[%s622 + $0x14] sm:$0xf]
        %v629 = vld [vmem:[%s622 + $0x18] sm:$0xf]
        %v630 = vld [vmem:[%s622 + $0x1c] sm:$0xf]
        %v631 = vld [vmem:[%s622 + $0x20] sm:$0xf]
        %v632 = vld [vmem:[%s622 + $0x24] sm:$0xf]
        %v633 = vld [vmem:[%s622 + $0x28] sm:$0xf]
        %v634 = vld [vmem:[%s622 + $0x2c] sm:$0xf]
        %v635 = vld [vmem:[%s622 + $0x30] sm:$0xf]
        %v636 = vld [vmem:[%s622 + $0x34] sm:$0xf]
        %v637 = vld [vmem:[%s622 + $0x38] sm:$0xf]
        %v638 = vld [vmem:[%s622 + $0x3c] sm:$0xf]
        %s639 = scalar_lea.vmem %s258, 4
        %v640 = vld [vmem:[%s639] sm:$0x1]
        %v641 = vpack.c.bf16 %v621, %v620
        %v643 = vperm.slane %v640, 0
        %v661 = vunpack.c.l.b16 %v623
        %v662 = vunpack.c.l.b16 %v624
        %v663 = vunpack.c.l.b16 %v625
        %v664 = vunpack.c.l.b16 %v626
        %v665 = vunpack.c.l.b16 %v627
        %v666 = vunpack.c.l.b16 %v628
        %v667 = vunpack.c.l.b16 %v629
        %v668 = vunpack.c.l.b16 %v630
        %v669 = vunpack.c.l.b16 %v631
        %v670 = vunpack.c.l.b16 %v632
        %v671 = vunpack.c.l.b16 %v633
        %v672 = vunpack.c.l.b16 %v634
        %v673 = vunpack.c.l.b16 %v635
        %v674 = vunpack.c.l.b16 %v636
        %v675 = vunpack.c.l.b16 %v637
        %v676 = vunpack.c.l.b16 %v638
        %v677 = vpack.c.b16 %v662, %v661
        %v678 = vpack.c.b16 %v664, %v663
        %v679 = vpack.c.b16 %v666, %v665
        %v680 = vpack.c.b16 %v668, %v667
        %v681 = vpack.c.b16 %v670, %v669
        %v682 = vpack.c.b16 %v672, %v671
        %v683 = vpack.c.b16 %v674, %v673
        %v684 = vpack.c.b16 %v676, %v675
        %693 = vmatpush.bf16.msra.mxu0 %v684
        %694 = vmatpush.bf16.msra.mxu0 %v683
        %695 = vmatpush.bf16.msra.mxu0 %v682
        %696 = vmatpush.bf16.msra.mxu0 %v681
        %697 = vmatpush.bf16.msra.mxu0 %v680
        %698 = vmatpush.bf16.msra.mxu0 %v679
        %699 = vmatpush.bf16.msra.mxu0 %v678
        %700 = vmatpush.bf16.msra.mxu0 %v677
        %701 = vmatmul.bf16.gmra.mxu0 %v641
        %v702 = vpop.f32.mrf.mxu0
        %v703 = vadd.f32 %v643, %v702
        %v704 = vpop.f32.mrf.mxu0
        %v705 = vadd.f32 %v643, %v704
        %706 = vdwg.mxu0
        %v707 = vmax.f32 %v703, 0.0
        %v708 = vmax.f32 %v705, 0.0
        %s709 = scalar_lea.vmem %s204, 320 [#allocation2]
        %v710 = vld [vmem:[%s709] sm:$0xf]
        %v711 = vld [vmem:[%s709 + $0x4] sm:$0xf]
        %v712 = vld [vmem:[%s709 + $0x8] sm:$0xf]
        %v713 = vld [vmem:[%s709 + $0xc] sm:$0xf]
        %v714 = vld [vmem:[%s709 + $0x10] sm:$0xf]
        %v715 = vld [vmem:[%s709 + $0x14] sm:$0xf]
        %v716 = vld [vmem:[%s709 + $0x18] sm:$0xf]
        %v717 = vld [vmem:[%s709 + $0x1c] sm:$0xf]
        %v718 = vld [vmem:[%s709 + $0x20] sm:$0xf]
        %v719 = vld [vmem:[%s709 + $0x24] sm:$0xf]
        %v720 = vld [vmem:[%s709 + $0x28] sm:$0xf]
        %v721 = vld [vmem:[%s709 + $0x2c] sm:$0xf]
        %v722 = vld [vmem:[%s709 + $0x30] sm:$0xf]
        %v723 = vld [vmem:[%s709 + $0x34] sm:$0xf]
        %v724 = vld [vmem:[%s709 + $0x38] sm:$0xf]
        %v725 = vld [vmem:[%s709 + $0x3c] sm:$0xf]
        %s726 = scalar_lea.vmem %s258, 5
        %v727 = vld [vmem:[%s726] sm:$0x1]
        %v728 = vpack.c.bf16 %v708, %v707
        %v730 = vperm.slane %v727, 0
        %v748 = vunpack.c.l.b16 %v710
        %v749 = vunpack.c.l.b16 %v711
        %v750 = vunpack.c.l.b16 %v712
        %v751 = vunpack.c.l.b16 %v713
        %v752 = vunpack.c.l.b16 %v714
        %v753 = vunpack.c.l.b16 %v715
        %v754 = vunpack.c.l.b16 %v716
        %v755 = vunpack.c.l.b16 %v717
        %v756 = vunpack.c.l.b16 %v718
        %v757 = vunpack.c.l.b16 %v719
        %v758 = vunpack.c.l.b16 %v720
        %v759 = vunpack.c.l.b16 %v721
        %v760 = vunpack.c.l.b16 %v722
        %v761 = vunpack.c.l.b16 %v723
        %v762 = vunpack.c.l.b16 %v724
        %v763 = vunpack.c.l.b16 %v725
        %v764 = vpack.c.b16 %v749, %v748
        %v765 = vpack.c.b16 %v751, %v750
        %v766 = vpack.c.b16 %v753, %v752
        %v767 = vpack.c.b16 %v755, %v754
        %v768 = vpack.c.b16 %v757, %v756
        %v769 = vpack.c.b16 %v759, %v758
        %v770 = vpack.c.b16 %v761, %v760
        %v771 = vpack.c.b16 %v763, %v762
        %780 = vmatpush.bf16.msra.mxu0 %v771
        %781 = vmatpush.bf16.msra.mxu0 %v770
        %782 = vmatpush.bf16.msra.mxu0 %v769
        %783 = vmatpush.bf16.msra.mxu0 %v768
        %784 = vmatpush.bf16.msra.mxu0 %v767
        %785 = vmatpush.bf16.msra.mxu0 %v766
        %786 = vmatpush.bf16.msra.mxu0 %v765
        %787 = vmatpush.bf16.msra.mxu0 %v764
        %788 = vmatmul.bf16.gmra.mxu0 %v728
        %v789 = vpop.f32.mrf.mxu0
        %v790 = vadd.f32 %v730, %v789
        %v791 = vpop.f32.mrf.mxu0
        %v792 = vadd.f32 %v730, %v791
        %793 = vdwg.mxu0
        %v794 = vmax.f32 %v790, 0.0
        %v795 = vmax.f32 %v792, 0.0
        %s796 = scalar_lea.vmem %s204, 384 [#allocation2]
        %v797 = vld [vmem:[%s796] sm:$0xf]
        %v798 = vld [vmem:[%s796 + $0x4] sm:$0xf]
        %v799 = vld [vmem:[%s796 + $0x8] sm:$0xf]
        %v800 = vld [vmem:[%s796 + $0xc] sm:$0xf]
        %v801 = vld [vmem:[%s796 + $0x10] sm:$0xf]
        %v802 = vld [vmem:[%s796 + $0x14] sm:$0xf]
        %v803 = vld [vmem:[%s796 + $0x18] sm:$0xf]
        %v804 = vld [vmem:[%s796 + $0x1c] sm:$0xf]
        %v805 = vld [vmem:[%s796 + $0x20] sm:$0xf]
        %v806 = vld [vmem:[%s796 + $0x24] sm:$0xf]
        %v807 = vld [vmem:[%s796 + $0x28] sm:$0xf]
        %v808 = vld [vmem:[%s796 + $0x2c] sm:$0xf]
        %v809 = vld [vmem:[%s796 + $0x30] sm:$0xf]
        %v810 = vld [vmem:[%s796 + $0x34] sm:$0xf]
        %v811 = vld [vmem:[%s796 + $0x38] sm:$0xf]
        %v812 = vld [vmem:[%s796 + $0x3c] sm:$0xf]
        %s813 = scalar_lea.vmem %s258, 6
        %v814 = vld [vmem:[%s813] sm:$0x1]
        %v815 = vpack.c.bf16 %v795, %v794
        %v817 = vperm.slane %v814, 0
        %v835 = vunpack.c.l.b16 %v797
        %v836 = vunpack.c.l.b16 %v798
        %v837 = vunpack.c.l.b16 %v799
        %v838 = vunpack.c.l.b16 %v800
        %v839 = vunpack.c.l.b16 %v801
        %v840 = vunpack.c.l.b16 %v802
        %v841 = vunpack.c.l.b16 %v803
        %v842 = vunpack.c.l.b16 %v804
        %v843 = vunpack.c.l.b16 %v805
        %v844 = vunpack.c.l.b16 %v806
        %v845 = vunpack.c.l.b16 %v807
        %v846 = vunpack.c.l.b16 %v808
        %v847 = vunpack.c.l.b16 %v809
        %v848 = vunpack.c.l.b16 %v810
        %v849 = vunpack.c.l.b16 %v811
        %v850 = vunpack.c.l.b16 %v812
        %v851 = vpack.c.b16 %v836, %v835
        %v852 = vpack.c.b16 %v838, %v837
        %v853 = vpack.c.b16 %v840, %v839
        %v854 = vpack.c.b16 %v842, %v841
        %v855 = vpack.c.b16 %v844, %v843
        %v856 = vpack.c.b16 %v846, %v845
        %v857 = vpack.c.b16 %v848, %v847
        %v858 = vpack.c.b16 %v850, %v849
        %867 = vmatpush.bf16.msra.mxu0 %v858
        %868 = vmatpush.bf16.msra.mxu0 %v857
        %869 = vmatpush.bf16.msra.mxu0 %v856
        %870 = vmatpush.bf16.msra.mxu0 %v855
        %871 = vmatpush.bf16.msra.mxu0 %v854
        %872 = vmatpush.bf16.msra.mxu0 %v853
        %873 = vmatpush.bf16.msra.mxu0 %v852
        %874 = vmatpush.bf16.msra.mxu0 %v851
        %875 = vmatmul.bf16.gmra.mxu0 %v815
        %v876 = vpop.f32.mrf.mxu0
        %v877 = vadd.f32 %v817, %v876
        %v878 = vpop.f32.mrf.mxu0
        %v879 = vadd.f32 %v817, %v878
        %880 = vdwg.mxu0
        %v881 = vpack.c.bf16 %v877, %v877
        %v882 = vpack.c.bf16 %v879, %v879
        %883 = vst [vmem:[%s267] sm:$0xf] %v881
        %884 = vst [vmem:[%s267 + $0x4] sm:$0xf] %v882
        %s885 = smul.u32 2, %s22
        %p886 = scmp.lt.s32.totalorder %s21, 1
        %s887 = scalar_select %p886, %s21, 1
        %p888 = scmp.lt.s32.totalorder %s885, 1
        %s889 = scalar_select %p888, %s885, 1
        %s890 = smul.addr %s887, 2
        %s891 = sadd.s32 %s889, %s890
        %s892 = smul.addr %s891, 4
        %s893 = scalar_lea.vmem %s3, %s892
        // Predicated region
        $region37: #{ensemble_transition_predictor_packed.1} parent=31 // pred_check
          %p894 = pneg %p129
        $region38: #{ensemble_transition_predictor_packed.1} parent=31 // pred_check_branch
          %896 = sbr.rel (%p894) target = $region40
        $region39: #{ensemble_transition_predictor_packed.1} parent=31 // pred_region
          %s897 = smul.u32 2, %s22
        $region40: #{ensemble_transition_predictor_packed.1} parent=31 // pred_fallthru
          _
      $region32: #{ensemble_transition_predictor_packed.1} parent=5 // pred_fallthru
        _
      %p898 = scmp.le.s32.totalorder 2, %s12
      // Predicated region
      $region41: #{ensemble_transition_predictor_packed.1} parent=5 // pred_check
        %p899 = pneg %p898
      $region42: #{ensemble_transition_predictor_packed.1} parent=5 // pred_check_branch
        %901 = sbr.rel (%p899) target = $region44
      $region43: #{ensemble_transition_predictor_packed.1} parent=5 // pred_region
        %s902 = ssub.s32 %s12, 2
        // Predicated region
        $region45: #{ensemble_transition_predictor_packed.1} parent=43 // pred_check
          %p903 = pneg %p135
        $region46: #{ensemble_transition_predictor_packed.1} parent=43 // pred_check_branch
          %905 = sbr.rel (%p903) target = $region48
        $region47: #{ensemble_transition_predictor_packed.1} parent=43 // pred_region
          %s906 = smul.u32 2, %s24
          %p907 = scmp.lt.s32.totalorder %s23, 1
          %s908 = scalar_select %p907, %s23, 1
          %p909 = scmp.lt.s32.totalorder %s906, 1
          %s910 = scalar_select %p909, %s906, 1
          %s911 = smul.addr %s908, 2
          %s912 = sadd.s32 %s910, %s911
          %s913 = smul.addr %s912, 4
          %s914 = scalar_lea.vmem %s3, %s913
        $region48: #{ensemble_transition_predictor_packed.1} parent=43 // pred_fallthru
          _
      $region44: #{ensemble_transition_predictor_packed.1} parent=5 // pred_fallthru
        _
    $region6: #{ensemble_transition_predictor_packed.1} parent=1 // loop_footer
      %s16 = sadd.s32 1, %s12
    $region7: #{ensemble_transition_predictor_packed.1} parent=1 // loop_footer_branch
      %11 = sbr.rel target = $region3
    $region8: #{ensemble_transition_predictor_packed.1} parent=1 // loop_exit
      _
    %915 = vsyncpa [#allocation3], 1
    %s916 = scalar_lea.sflag [#allocation3], 1
    %917 = vsyncpa %s916, 1

</llo_original>
